<compile_context>
chip_gen: v7x
topology: tpu7x:2x2x1
jax: 0.10.0
libtpu: 0.0.40
codegen_flags: <defaults>
</compile_context>

<pallas_src>
import functools
import math

import jax
import jax.numpy as jnp
from jax.experimental import pallas as pl
from jax.experimental.pallas import tpu as pltpu


# ---------------------------------------------------------------------------
# Tiling helpers
# ---------------------------------------------------------------------------

_MAX_TM = 256            # output-row tile
_MAX_TN = 512            # output-col tile
_MAX_TK = 512            # reduction tile when K is streamed
_SINGLE_K_MAX = 8192     # up to this K the whole reduction is one resident tile
_VMEM_LIMIT = 32 * 1024 * 1024   # safe on v5e/v6e (128 MiB) and v7x (64 MiB)


def _round_up(x, m):
    return ((x + m - 1) // m) * m


def _tile_m(m):
    if m <= _MAX_TM:
        return m, m                       # full-dim block
    return _MAX_TM, _round_up(m, _MAX_TM)


def _tile_n(n):
    if n <= _MAX_TN:
        return n, n
    return _MAX_TN, _round_up(n, _MAX_TN)


def _tile_k(k):
    if k <= _SINGLE_K_MAX:
        return k, k                       # single resident K tile (no k loop)
    return _MAX_TK, _round_up(k, _MAX_TK)


# ---------------------------------------------------------------------------
# Fused matmul + bias(+folded BN) + ReLU kernel  (bf16 MXU, f32 accumulation)
# ---------------------------------------------------------------------------

def _mm_bias_act_kernel(a_ref, b_ref, bias_ref, o_ref, acc_ref, *, relu):
    @pl.when(pl.program_id(2) == 0)
    def _init():
        acc_ref[...] = jnp.zeros_like(acc_ref)

    acc_ref[...] += jnp.dot(a_ref[...], b_ref[...],
                            preferred_element_type=jnp.float32)

    @pl.when(pl.program_id(2) == pl.num_programs(2) - 1)
    def _epilogue():
        r = acc_ref[...] + bias_ref[...]
        if relu:
            r = jnp.maximum(r, 0.0)
        o_ref[...] = r.astype(o_ref.dtype)


def matmul_bias_act(a, b, bias, n_out, relu):
    """(M,K) @ (Kp,Np) + bias, optional ReLU.  `b`/`bias` are pre-padded bf16/f32
    from the parameter builder; `a` is the bf16 activation / im2col matrix."""
    m, k = a.shape
    tm, mp = _tile_m(m)
    tk, kp = _tile_k(k)
    tn, np_ = _tile_n(n_out)
    assert b.shape == (kp, np_), (b.shape, kp, np_)
    assert bias.shape == (1, np_), (bias.shape, np_)
    if (mp, kp) != (m, k):
        a = jnp.pad(a, ((0, mp - m), (0, kp - k)))
    a = a.astype(jnp.bfloat16)

    grid = (mp // tm, np_ // tn, kp // tk)
    out = pl.pallas_call(
        functools.partial(_mm_bias_act_kernel, relu=relu),
        out_shape=jax.ShapeDtypeStruct((mp, np_), jnp.bfloat16),
        grid=grid,
        in_specs=[
            pl.BlockSpec((tm, tk), lambda i, j, kk: (i, kk)),
            pl.BlockSpec((tk, tn), lambda i, j, kk: (kk, j)),
            pl.BlockSpec((1, tn), lambda i, j, kk: (0, j)),
        ],
        out_specs=pl.BlockSpec((tm, tn), lambda i, j, kk: (i, j)),
        scratch_shapes=[pltpu.VMEM((tm, tn), jnp.float32)],
        compiler_params=pltpu.CompilerParams(
            dimension_semantics=("parallel", "parallel", "arbitrary"),
            vmem_limit_bytes=_VMEM_LIMIT,
        ),
    )(a, b, bias)
    if (mp, np_) != (m, n_out):
        out = out[:m, :n_out]
    return out


# ---------------------------------------------------------------------------
# MaxPool2d(2, 2) kernel — reads the activation once, 4-way max in-kernel
# ---------------------------------------------------------------------------

def _maxpool_kernel(x_ref, o_ref):
    v = x_ref[...]                                # (rows, 2, Wo, 2, C)
    m = jnp.maximum(v[:, 0], v[:, 1])             # (rows, Wo, 2, C)
    o_ref[...] = jnp.maximum(m[:, :, 0, :], m[:, :, 1, :])


def maxpool2x2(x):
    n, h, w, c = x.shape
    assert h % 2 == 0 and w % 2 == 0
    ho, wo = h // 2, w // 2
    xr = x.reshape(n * ho, 2, wo, 2, c)           # free, contiguity-preserving
    out = pl.pallas_call(
        _maxpool_kernel,
        out_shape=jax.ShapeDtypeStruct((n * ho, wo, c), x.dtype),
        grid=(1,),
        in_specs=[pl.BlockSpec((n * ho, 2, wo, 2, c),
                               lambda i: (0, 0, 0, 0, 0))],
        out_specs=pl.BlockSpec((n * ho, wo, c), lambda i: (0, 0, 0)),
        compiler_params=pltpu.CompilerParams(vmem_limit_bytes=_VMEM_LIMIT),
    )(xr)
    return out.reshape(n, ho, wo, c)


# ---------------------------------------------------------------------------
# Bilinear upsample x2 (align_corners=True): JAX gather + Pallas lerp kernel
# ---------------------------------------------------------------------------

def _bilerp_kernel(tl_ref, tr_ref, bl_ref, br_ref, fx_ref, fy_ref, o_ref):
    tl = tl_ref[...].astype(jnp.float32)
    tr = tr_ref[...].astype(jnp.float32)
    bl = bl_ref[...].astype(jnp.float32)
    br = br_ref[...].astype(jnp.float32)
    fx = fx_ref[...]
    fy = fy_ref[...]
    top = tl + (tr - tl) * fx
    bot = bl + (br - bl) * fx
    o_ref[...] = (top + (bot - top) * fy).astype(o_ref.dtype)


def _lin_coords(size_in, size_out):
    if size_in == 1:
        z = jnp.zeros((size_out,), jnp.int32)
        return z, z, jnp.zeros((size_out,), jnp.float32)
    s = jnp.arange(size_out, dtype=jnp.float32) * (
        (size_in - 1) / (size_out - 1))
    i0 = jnp.clip(jnp.floor(s).astype(jnp.int32), 0, size_in - 1)
    i1 = jnp.minimum(i0 + 1, size_in - 1)
    f = s - i0.astype(jnp.float32)
    return i0, i1, f


def upsample2x_bilinear(x):
    """nn.Upsample(scale_factor=2, mode='bilinear', align_corners=True), NHWC."""
    n, h, w, c = x.shape
    ho, wo = 2 * h, 2 * w
    iy0, iy1, fy = _lin_coords(h, ho)
    ix0, ix1, fx = _lin_coords(w, wo)
    top = jnp.take(x, iy0, axis=1)
    bot = jnp.take(x, iy1, axis=1)
    tl = jnp.take(top, ix0, axis=2)
    tr = jnp.take(top, ix1, axis=2)
    bl = jnp.take(bot, ix0, axis=2)
    br = jnp.take(bot, ix1, axis=2)
    m = n * ho * wo
    fx_f = jnp.broadcast_to(fx[None, None, :], (n, ho, wo)).reshape(m, 1)
    fy_f = jnp.broadcast_to(fy[None, :, None], (n, ho, wo)).reshape(m, 1)
    flat = lambda t: t.reshape(m, c)
    out = pl.pallas_call(
        _bilerp_kernel,
        out_shape=jax.ShapeDtypeStruct((m, c), x.dtype),
        grid=(1,),
        in_specs=[pl.BlockSpec((m, c), lambda i: (0, 0))] * 4
                 + [pl.BlockSpec((m, 1), lambda i: (0, 0))] * 2,
        out_specs=pl.BlockSpec((m, c), lambda i: (0, 0)),
        compiler_params=pltpu.CompilerParams(vmem_limit_bytes=_VMEM_LIMIT),
    )(flat(tl), flat(tr), flat(bl), flat(br), fx_f, fy_f)
    return out.reshape(n, ho, wo, c)


# ---------------------------------------------------------------------------
# Convolution layers (im2col glue + fused Pallas matmul)
# ---------------------------------------------------------------------------

def conv_apply(layer, x, relu):
    """Conv2d (3x3 pad=1 or 1x1) with folded BN + bias, optional ReLU.  NHWC."""
    n, h, w, c = x.shape
    k = layer["ksize"]
    if k == 3:
        xp = jnp.pad(x, ((0, 0), (1, 1), (1, 1), (0, 0)))
        cols = [xp[:, di:di + h, dj:dj + w, :]
                for di in range(3) for dj in range(3)]
        a = jnp.concatenate(cols, axis=-1).reshape(n * h * w, 9 * c)
    else:
        a = x.reshape(n * h * w, c)
    y = matmul_bias_act(a, layer["wmat"], layer["bias"], layer["cout"], relu)
    return y.reshape(n, h, w, layer["cout"])


def _vgg_block(block, x):
    x = conv_apply(block["c1"], x, relu=True)
    x = conv_apply(block["c2"], x, relu=True)
    return x


# ---------------------------------------------------------------------------
# Parameter construction (deterministic synthetic weights; BN folded, eval mode)
# ---------------------------------------------------------------------------

def _build_conv(key, cin, cout, ksize, fold_bn):
    kw_key, kb_key = jax.random.split(key)
    fan_in = cin * ksize * ksize
    w = jax.random.normal(kw_key, (cout, cin, ksize, ksize),
                          jnp.float32) * math.sqrt(2.0 / fan_in)
    b = jax.random.normal(kb_key, (cout,), jnp.float32) * 0.01
    if fold_bn:
        eps = 1e-5
        gamma = jnp.ones((cout,), jnp.float32)
        beta = jnp.zeros((cout,), jnp.float32)
        mean = jnp.zeros((cout,), jnp.float32)
        var = jnp.ones((cout,), jnp.float32)
        scale = gamma * jax.lax.rsqrt(var + eps)
        w = w * scale[:, None, None, None]
        b = (b - mean) * scale + beta
    # (O, I, kh, kw) -> (kh*kw*I, O): row order (di, dj, ci) matches im2col columns.
    wmat = jnp.transpose(w, (2, 3, 1, 0)).reshape(ksize * ksize * cin, cout)
    k_dim, n_dim = wmat.shape
    _, kp = _tile_k(k_dim)
    _, np_ = _tile_n(n_dim)
    wmat = jnp.pad(wmat, ((0, kp - k_dim), (0, np_ - n_dim))).astype(jnp.bfloat16)
    bias = jnp.pad(b, (0, np_ - n_dim)).reshape(1, np_).astype(jnp.float32)
    return {"wmat": wmat, "bias": bias, "cout": cout, "ksize": ksize}


def _build_vgg_block(key, cin, cmid, cout):
    k1, k2 = jax.random.split(key)
    return {"c1": _build_conv(k1, cin, cmid, 3, True),
            "c2": _build_conv(k2, cmid, cout, 3, True)}


def make_params(num_classes, input_channels, key):
    nb = [64, 128, 256, 512, 1024]
    specs = {
        "conv0_0": (input_channels, nb[0], nb[0]),
        "conv1_0": (nb[0], nb[1], nb[1]),
        "conv2_0": (nb[1], nb[2], nb[2]),
        "conv3_0": (nb[2], nb[3], nb[3]),
        "conv4_0": (nb[3], nb[4], nb[4]),
        "conv3_1": (nb[3] + nb[4], nb[3], nb[3]),
        "conv2_2": (nb[2] + nb[3], nb[2], nb[2]),
        "conv1_3": (nb[1] + nb[2], nb[1], nb[1]),
        "conv0_4": (nb[0] + nb[1], nb[0], nb[0]),
    }
    keys = jax.random.split(key, len(specs) + 1)
    params = {}
    for kk, (name, (ci, cm, co)) in zip(keys[:-1], specs.items()):
        params[name] = _build_vgg_block(kk, ci, cm, co)
    params["final"] = _build_conv(keys[-1], nb[0], num_classes, 1, False)
    return params


# ---------------------------------------------------------------------------
# Unet forward
# ---------------------------------------------------------------------------

def unet_forward(params, x_nchw):
    x = jnp.transpose(x_nchw, (0, 2, 3, 1)).astype(jnp.bfloat16)     # NHWC bf16

    x0_0 = _vgg_block(params["conv0_0"], x)
    x1_0 = _vgg_block(params["conv1_0"], maxpool2x2(x0_0))
    x2_0 = _vgg_block(params["conv2_0"], maxpool2x2(x1_0))
    x3_0 = _vgg_block(params["conv3_0"], maxpool2x2(x2_0))
    x4_0 = _vgg_block(params["conv4_0"], maxpool2x2(x3_0))

    x3_1 = _vgg_block(params["conv3_1"],
                      jnp.concatenate([x3_0, upsample2x_bilinear(x4_0)], axis=-1))
    x2_2 = _vgg_block(params["conv2_2"],
                      jnp.concatenate([x2_0, upsample2x_bilinear(x3_1)], axis=-1))
    x1_3 = _vgg_block(params["conv1_3"],
                      jnp.concatenate([x1_0, upsample2x_bilinear(x2_2)], axis=-1))
    x0_4 = _vgg_block(params["conv0_4"],
                      jnp.concatenate([x0_0, upsample2x_bilinear(x1_3)], axis=-1))

    out = conv_apply(params["final"], x0_4, relu=False)
    return jnp.transpose(out, (0, 3, 1, 2)).astype(jnp.float32)      # NCHW f32


# ---------------------------------------------------------------------------

if __name__ == "__main__":
    num_classes = 5
    input_channels = 4
    B, H, W = 2, 16, 16

    key = jax.random.PRNGKey(0)
    kx, kp = jax.random.split(key)
    X = jax.random.normal(kx, (B, input_channels, H, W), jnp.float32)
    params = make_params(num_classes, input_channels, kp)

    out = unet_forward(params, X)
    out = jax.block_until_ready(out)

    assert out.shape == (B, num_classes, H, W), out.shape
    assert out.dtype == jnp.float32
    assert bool(jnp.all(jnp.isfinite(out)))
    print("KERNEL_OK")
</pallas_src>

<mosaic_0001>
module attributes {stable_mosaic.version = 11 : i64} {
  func.func @_mm_bias_act_kernel(%arg0: i32, %arg1: i32, %arg2: i32, %arg3: memref<256x36xbf16, #tpu.memory_space<vmem>>, %arg4: memref<36x64xbf16, #tpu.memory_space<vmem>>, %arg5: memref<1x64xf32, #tpu.memory_space<vmem>>, %arg6: memref<256x64xbf16, #tpu.memory_space<vmem>>, %arg7: memref<256x64xf32, #tpu.memory_space<vmem>>) attributes {dimension_semantics = [#tpu.dimension_semantics<parallel>, #tpu.dimension_semantics<parallel>, #tpu.dimension_semantics<arbitrary>], iteration_bounds = array<i64: 2, 1, 1>, scalar_prefetch = 0 : i64, scratch_operands = 1 : i64, tpu.core_type = #tpu.core_type<tc>, window_params = [{transform_indices = @transform_0, window_bounds = array<i64: 256, 36>}, {transform_indices = @transform_1, window_bounds = array<i64: 36, 64>}, {transform_indices = @transform_2, window_bounds = array<i64: 1, 64>}, {transform_indices = @transform_3, window_bounds = array<i64: 256, 64>}]} {
    %c0_i32 = arith.constant 0 : i32
    %0 = arith.cmpi eq, %arg2, %c0_i32 : i32
    %1 = arith.extui %0 : i1 to i32
    %c0_i32_0 = arith.constant 0 : i32
    %2 = arith.cmpi ne, %1, %c0_i32_0 : i32
    scf.if %2 {
      %cst_10 = arith.constant 0.000000e+00 : f32
      %12 = vector.broadcast %cst_10 : f32 to vector<256x64xf32>
      %c0_11 = arith.constant 0 : index
      %c0_12 = arith.constant 0 : index
      %13 = vector.load %arg7[%c0_11, %c0_12] : memref<256x64xf32, #tpu.memory_space<vmem>>, vector<256x64xf32>
      tpu.vector_store %arg7[%c0_11, %c0_12], %12 {strides = array<i32>} : memref<256x64xf32, #tpu.memory_space<vmem>>, vector<256x64xf32>,
    } else {
    }
    %c0 = arith.constant 0 : index
    %c0_1 = arith.constant 0 : index
    %3 = vector.load %arg7[%c0, %c0_1] : memref<256x64xf32, #tpu.memory_space<vmem>>, vector<256x64xf32>
    %c0_2 = arith.constant 0 : index
    %c0_3 = arith.constant 0 : index
    %4 = vector.load %arg3[%c0_2, %c0_3] : memref<256x36xbf16, #tpu.memory_space<vmem>>, vector<256x36xbf16>
    %c0_4 = arith.constant 0 : index
    %c0_5 = arith.constant 0 : index
    %5 = vector.load %arg4[%c0_4, %c0_5] : memref<36x64xbf16, #tpu.memory_space<vmem>>, vector<36x64xbf16>
    %cst = arith.constant dense<0.000000e+00> : vector<256x64xf32>
    %6 = tpu.matmul %4, %5, %cst {dimension_numbers = #tpu.dot_dimension_numbers<[1], [0], [0], [1], [0, 0, 1, 1], [], []>} : vector<256x36xbf16>, vector<36x64xbf16>, vector<256x64xf32> -> vector<256x64xf32>
    %7 = arith.addf %3, %6 : vector<256x64xf32>
    %c0_6 = arith.constant 0 : index
    %c0_7 = arith.constant 0 : index
    %8 = vector.load %arg7[%c0_6, %c0_7] : memref<256x64xf32, #tpu.memory_space<vmem>>, vector<256x64xf32>
    tpu.vector_store %arg7[%c0_6, %c0_7], %7 {strides = array<i32>} : memref<256x64xf32, #tpu.memory_space<vmem>>, vector<256x64xf32>,
    %c0_i32_8 = arith.constant 0 : i32
    %9 = arith.cmpi eq, %arg2, %c0_i32_8 : i32
    %10 = arith.extui %9 : i1 to i32
    %c0_i32_9 = arith.constant 0 : i32
    %11 = arith.cmpi ne, %10, %c0_i32_9 : i32
    scf.if %11 {
      %c0_10 = arith.constant 0 : index
      %c0_11 = arith.constant 0 : index
      %12 = vector.load %arg7[%c0_10, %c0_11] : memref<256x64xf32, #tpu.memory_space<vmem>>, vector<256x64xf32>
      %c0_12 = arith.constant 0 : index
      %c0_13 = arith.constant 0 : index
      %13 = vector.load %arg5[%c0_12, %c0_13] : memref<1x64xf32, #tpu.memory_space<vmem>>, vector<1x64xf32>
      %14 = vector.broadcast %13 : vector<1x64xf32> to vector<256x64xf32>
      %15 = arith.addf %12, %14 : vector<256x64xf32>
      %cst_14 = arith.constant 0.000000e+00 : f32
      %16 = vector.broadcast %cst_14 : f32 to vector<256x64xf32>
      %17 = arith.maximumf %15, %16 : vector<256x64xf32>
      %18 = arith.truncf %17 : vector<256x64xf32> to vector<256x64xbf16>
      %c0_15 = arith.constant 0 : index
      %c0_16 = arith.constant 0 : index
      %19 = vector.load %arg6[%c0_15, %c0_16] : memref<256x64xbf16, #tpu.memory_space<vmem>>, vector<256x64xbf16>
      tpu.vector_store %arg6[%c0_15, %c0_16], %18 {strides = array<i32>} : memref<256x64xbf16, #tpu.memory_space<vmem>>, vector<256x64xbf16>,
    } else {
    }
    return
  }
  func.func @transform_0(%arg0: i32, %arg1: i32, %arg2: i32) -> (i32, i32) {
    %c0_i32 = arith.constant 0 : i32
    return %arg0, %arg2 : i32, i32
  }
  func.func @transform_1(%arg0: i32, %arg1: i32, %arg2: i32) -> (i32, i32) {
    %c0_i32 = arith.constant 0 : i32
    return %arg2, %arg1 : i32, i32
  }
  func.func @transform_2(%arg0: i32, %arg1: i32, %arg2: i32) -> (i32, i32) {
    %c0_i32 = arith.constant 0 : i32
    %c0_i32_0 = arith.constant 0 : i32
    return %c0_i32, %arg1 : i32, i32
  }
  func.func @transform_3(%arg0: i32, %arg1: i32, %arg2: i32) -> (i32, i32) {
    %c0_i32 = arith.constant 0 : i32
    return %arg0, %arg1 : i32, i32
  }
}

</mosaic_0001>

<llo_original>
// kernel: tpu_custom_call.1
$region0: #{tpu_custom_call.1}
  #allocation0 [shape = 'u32[]', space=smem, size = 0x4, offset = 0x4, fixed_abs, tag = 'smem constant byte address 0x4 - core index']
  #allocation1 [shape = 'u32[144,128]{1,0:T(1,128)}', space=vmem, size = 0x12000, scoped, tag = 'internal scratch']
  #allocation2 [shape = 'f32[256,64]{1,0:T(8,128)}', space=vmem, size = 0x20000, scoped, tag = 'scratch operand']
  %s0 = inlined_call_operand.vmem [shape: bf16[512,36], index: 0, kind: input, shape index: {}]
  %s1 = inlined_call_operand.vmem [shape: bf16[36,64], index: 1, kind: input, shape index: {}]
  %s2 = inlined_call_operand.vmem [shape: f32[1,64], index: 2, kind: input, shape index: {}]
  %s3 = inlined_call_operand.vmem [shape: bf16[512,64], index: 3, kind: output, shape index: {}]
  %s4 = sld [smem:[#allocation0]]
  $region53: #{tpu_custom_call.1} parent=0
    _
  %s6 = ssub.s32 1, %s4
  %s7 = scalar_select 0, %s6, %s4
  loop: start=0, step=1, limit=4
  $region2: #{tpu_custom_call.1} parent=0 // loop_pre_header
    _
  $region3: #{tpu_custom_call.1} parent=0 // loop_header
    %s9 = sphi 0, %s13
    %p10 = scmp.ge.s32.totalorder %s9, 4
    %s16 = sphi 0, %s35
    %s17 = sphi 0, %s31
    %s18 = sphi 0, %s27
    %s19 = sphi 0, %s16
    %s20 = sphi 0, %s17
    %s21 = sphi 0, %s18
    %s22 = sphi 0, %s19
    %s23 = sphi 0, %s20
    %s24 = sphi 0, %s21
    %s40 = sphi 0, %s42
    %s43 = sphi 0, %s40
    %s44 = sphi 0, %s43
    %s60 = sphi 0, %s44
    %s68 = sphi 0, %s70
    %s71 = sphi 0, %s68
    %s72 = sphi 0, %s71
    %s88 = sphi 0, %s72
    %s94 = sphi 0, %s96
    %s97 = sphi 0, %s94
    %s98 = sphi 0, %s97
    %s114 = sphi 0, %s98
    %s122 = sphi 0, %s124
    %s125 = sphi 0, %s122
    %s126 = sphi 0, %s125
    %s142 = sphi 0, %s126
  $region4: #{tpu_custom_call.1} parent=0 // loop_header_branch
    %12 = sbr.rel (%p10) target = $region8
  $region5: #{tpu_custom_call.1} parent=0 // loop_body
    %s14 = ssub.s32 %s9, 1
    %s15 = ssub.s32 %s9, 2
    %s25 = sadd.s32 1, %s18
    %p26 = scmp.ge.s32.totalorder %s25, 1
    %s27 = scalar_select %p26, 0, %s25
    %s28 = sadd.s32 1, %s17
    %s29 = scalar_select %p26, %s28, %s17
    %p30 = scmp.ge.s32.totalorder %s29, 1
    %s31 = scalar_select %p30, 0, %s29
    %s32 = sadd.s32 1, %s16
    %s33 = scalar_select %p30, %s32, %s16
    %p34 = scmp.ge.s32.totalorder %s33, 2
    %s35 = scalar_select %p34, 0, %s33
    %s36 = ssub.s32 %s16, %s35
    %s37 = ssub.s32 %s18, %s27
    %s38 = sor.u32 %s36, %s37
    %p39 = scmp.eq.s32.totalorder %s38, 0
    %s41 = sadd.s32 %s40, 1
    %s42 = scalar_select %p39, %s40, %s41
    %p45 = pneg %p39
    %p46 = scmp.eq.s32.totalorder %s9, 1
    %p47 = por %p45, %p46
    %p48 = scmp.ne.s32.totalorder %s40, %s43
    %p49 = scmp.eq.s32.totalorder %s9, 0
    %p50 = por %p48, %p49
    %p51 = scmp.ne.s32.totalorder %s40, %s43
    %p52 = scmp.eq.s32.totalorder %s14, 1
    %p53 = por %p51, %p52
    %p54 = scmp.ne.s32.totalorder %s43, %s44
    %p55 = scmp.eq.s32.totalorder %s14, 0
    %p56 = por %p54, %p55
    %p57 = scmp.ne.s32.totalorder %s43, %s44
    %p58 = scmp.eq.s32.totalorder %s15, 1
    %p59 = por %p57, %p58
    %p61 = scmp.ne.s32.totalorder %s44, %s60
    %p62 = scmp.eq.s32.totalorder %s15, 0
    %p63 = por %p61, %p62
    %s64 = ssub.s32 %s18, %s27
    %s65 = ssub.s32 %s17, %s31
    %s66 = sor.u32 %s64, %s65
    %p67 = scmp.eq.s32.totalorder %s66, 0
    %s69 = sadd.s32 %s68, 1
    %s70 = scalar_select %p67, %s68, %s69
    %p73 = pneg %p67
    %p74 = scmp.eq.s32.totalorder %s9, 1
    %p75 = por %p73, %p74
    %p76 = scmp.ne.s32.totalorder %s68, %s71
    %p77 = scmp.eq.s32.totalorder %s9, 0
    %p78 = por %p76, %p77
    %p79 = scmp.ne.s32.totalorder %s68, %s71
    %p80 = scmp.eq.s32.totalorder %s14, 1
    %p81 = por %p79, %p80
    %p82 = scmp.ne.s32.totalorder %s71, %s72
    %p83 = scmp.eq.s32.totalorder %s14, 0
    %p84 = por %p82, %p83
    %p85 = scmp.ne.s32.totalorder %s71, %s72
    %p86 = scmp.eq.s32.totalorder %s15, 1
    %p87 = por %p85, %p86
    %p89 = scmp.ne.s32.totalorder %s72, %s88
    %p90 = scmp.eq.s32.totalorder %s15, 0
    %p91 = por %p89, %p90
    %s92 = ssub.s32 %s17, %s31
    %p93 = scmp.eq.s32.totalorder %s92, 0
    %s95 = sadd.s32 %s94, 1
    %s96 = scalar_select %p93, %s94, %s95
    %p99 = pneg %p93
    %p100 = scmp.eq.s32.totalorder %s9, 1
    %p101 = por %p99, %p100
    %p102 = scmp.ne.s32.totalorder %s94, %s97
    %p103 = scmp.eq.s32.totalorder %s9, 0
    %p104 = por %p102, %p103
    %p105 = scmp.ne.s32.totalorder %s94, %s97
    %p106 = scmp.eq.s32.totalorder %s14, 1
    %p107 = por %p105, %p106
    %p108 = scmp.ne.s32.totalorder %s97, %s98
    %p109 = scmp.eq.s32.totalorder %s14, 0
    %p110 = por %p108, %p109
    %p111 = scmp.ne.s32.totalorder %s97, %s98
    %p112 = scmp.eq.s32.totalorder %s15, 1
    %p113 = por %p111, %p112
    %p115 = scmp.ne.s32.totalorder %s98, %s114
    %p116 = scmp.eq.s32.totalorder %s15, 0
    %p117 = por %p115, %p116
    %s118 = ssub.s32 %s16, %s35
    %s119 = ssub.s32 %s17, %s31
    %s120 = sor.u32 %s118, %s119
    %p121 = scmp.eq.s32.totalorder %s120, 0
    %s123 = sadd.s32 %s122, 1
    %s124 = scalar_select %p121, %s122, %s123
    %p127 = pneg %p121
    %p128 = scmp.eq.s32.totalorder %s9, 1
    %p129 = por %p127, %p128
    %p130 = scmp.ne.s32.totalorder %s122, %s125
    %p131 = scmp.eq.s32.totalorder %s9, 0
    %p132 = por %p130, %p131
    %p133 = scmp.ne.s32.totalorder %s122, %s125
    %p134 = scmp.eq.s32.totalorder %s14, 1
    %p135 = por %p133, %p134
    %p136 = scmp.ne.s32.totalorder %s125, %s126
    %p137 = scmp.eq.s32.totalorder %s14, 0
    %p138 = por %p136, %p137
    %p139 = scmp.ne.s32.totalorder %s125, %s126
    %p140 = scmp.eq.s32.totalorder %s15, 1
    %p141 = por %p139, %p140
    %p143 = scmp.ne.s32.totalorder %s126, %s142
    %p144 = scmp.eq.s32.totalorder %s15, 0
    %p145 = por %p143, %p144
    %p146 = scmp.le.s32.totalorder 1, %s9
    %p147 = scmp.lt.s32.totalorder %s9, 3
    %p148 = pnand %p146, %p147
    %p149 = pneg %p148
    // Predicated region
    $region9: #{tpu_custom_call.1} parent=5 // pred_check
      _
    $region10: #{tpu_custom_call.1} parent=5 // pred_check_branch
      %151 = sbr.rel (%p148) target = $region12
    $region11: #{tpu_custom_call.1} parent=5 // pred_region
      %s152 = ssub.s32 %s9, 1
      // Predicated region
      $region13: #{tpu_custom_call.1} parent=11 // pred_check
        %p153 = pneg %p84
      $region14: #{tpu_custom_call.1} parent=11 // pred_check_branch
        %155 = sbr.rel (%p153) target = $region16
      $region15: #{tpu_custom_call.1} parent=11 // pred_region
        %s156 = smul.u32 5, %s21
        %p157 = scmp.lt.s32.totalorder %s156, 4
        %s158 = scalar_select %p157, %s156, 4
        %p159 = scmp.lt.s32.totalorder %s20, 0
        %s160 = scalar_select %p159, %s20, 0
        %s161 = sadd.s32 %s160, %s158
        %s162 = smul.addr %s161, 4
        %s163 = scalar_lea.vmem %s1, %s162
        %s164 = smul.u32 5, %s21
      $region16: #{tpu_custom_call.1} parent=11 // pred_fallthru
        _
      // Predicated region
      $region17: #{tpu_custom_call.1} parent=11 // pred_check
        %p165 = pneg %p110
      $region18: #{tpu_custom_call.1} parent=11 // pred_check_branch
        %167 = sbr.rel (%p165) target = $region20
      $region19: #{tpu_custom_call.1} parent=11 // pred_region
        %p168 = scmp.lt.s32.totalorder %s20, 0
        %s169 = scalar_select %p168, %s20, 0
        %s170 = scalar_lea.vmem %s2, %s169
      $region20: #{tpu_custom_call.1} parent=11 // pred_fallthru
        _
    $region12: #{tpu_custom_call.1} parent=5 // pred_fallthru
      _
    %p171 = scmp.lt.s32.totalorder %s9, 2
    // Predicated region
    $region21: #{tpu_custom_call.1} parent=5 // pred_check
      %p172 = pneg %p171
    $region22: #{tpu_custom_call.1} parent=5 // pred_check_branch
      %174 = sbr.rel (%p172) target = $region24
    $region23: #{tpu_custom_call.1} parent=5 // pred_region
      // Predicated region
      $region25: #{tpu_custom_call.1} parent=23 // pred_check
        %p175 = pneg %p50
      $region26: #{tpu_custom_call.1} parent=23 // pred_check_branch
        %177 = sbr.rel (%p175) target = $region28
      $region27: #{tpu_custom_call.1} parent=23 // pred_region
        %s178 = smul.u32 32, %s16
        %p179 = scmp.lt.s32.totalorder %s178, 63
        %s180 = scalar_select %p179, %s178, 63
        %p181 = scmp.lt.s32.totalorder %s18, 0
        %s182 = scalar_select %p181, %s18, 0
        %s183 = sadd.s32 %s182, %s180
        %s184 = smul.addr %s183, 4
        %s185 = scalar_lea.vmem %s0, %s184
        %s186 = smul.u32 32, %s16
      $region28: #{tpu_custom_call.1} parent=23 // pred_fallthru
        _
    $region24: #{tpu_custom_call.1} parent=5 // pred_fallthru
      _
    %p187 = scmp.le.s32.totalorder 1, %s9
    %p188 = scmp.lt.s32.totalorder %s9, 3
    %p189 = pnand %p187, %p188
    %p190 = pneg %p189
    // Predicated region
    $region29: #{tpu_custom_call.1} parent=5 // pred_check
      _
    $region30: #{tpu_custom_call.1} parent=5 // pred_check_branch
      %192 = sbr.rel (%p189) target = $region32
    $region31: #{tpu_custom_call.1} parent=5 // pred_region
      %s193 = ssub.s32 %s9, 1
      %s194 = smul.u32 32, %s19
      %p195 = scmp.lt.s32.totalorder %s194, 63
      %s196 = scalar_select %p195, %s194, 63
      %p197 = scmp.lt.s32.totalorder %s21, 0
      %s198 = scalar_select %p197, %s21, 0
      %s199 = sadd.s32 %s198, %s196
      %s200 = smul.addr %s199, 4
      %s201 = scalar_lea.vmem %s0, %s200
      %p202 = pneg %p56
      %p203 = pneg %p53
      %s204 = smul.u32 5, %s21
      %p205 = scmp.lt.s32.totalorder %s204, 4
      %s206 = scalar_select %p205, %s204, 4
      %p207 = scmp.lt.s32.totalorder %s20, 0
      %s208 = scalar_select %p207, %s20, 0
      %s209 = sadd.s32 %s208, %s206
      %s210 = smul.addr %s209, 4
      %s211 = scalar_lea.vmem %s1, %s210
      %p212 = pneg %p84
      %p213 = pneg %p81
      %p214 = scmp.lt.s32.totalorder %s20, 0
      %s215 = scalar_select %p214, %s20, 0
      %s216 = scalar_lea.vmem %s2, %s215
      %p217 = pneg %p110
      %p218 = pneg %p107
      %p219 = pneg %p138
      %p220 = pneg %p135
      %s221 = smul.u32 32, %s19
      %p222 = scmp.lt.s32.totalorder %s221, 63
      %s223 = scalar_select %p222, %s221, 63
      %p224 = scmp.lt.s32.totalorder %s20, 0
      %s225 = scalar_select %p224, %s20, 0
      %s226 = sadd.s32 %s225, %s223
      %s227 = smul.addr %s226, 4
      %s228 = scalar_lea.vmem %s3, %s227
      %s229 = smul.u32 32, %s19
      %p230 = scmp.lt.s32.totalorder %s229, 63
      %s231 = scalar_select %p230, %s229, 63
      %p232 = scmp.lt.s32.totalorder %s21, 0
      %s233 = scalar_select %p232, %s21, 0
      %s234 = sadd.s32 %s233, %s231
      %s235 = smul.addr %s234, 4
      %s236 = scalar_lea.vmem %s0, %s235
      %s237 = smul.u32 32, %s19
      %s238 = smul.u32 5, %s21
      %p239 = scmp.lt.s32.totalorder %s238, 4
      %s240 = scalar_select %p239, %s238, 4
      %p241 = scmp.lt.s32.totalorder %s20, 0
      %s242 = scalar_select %p241, %s20, 0
      %s243 = sadd.s32 %s242, %s240
      %s244 = smul.addr %s243, 4
      %s245 = scalar_lea.vmem %s1, %s244
      %s246 = smul.u32 5, %s21
      %p247 = scmp.lt.s32.totalorder %s20, 0
      %s248 = scalar_select %p247, %s20, 0
      %s249 = scalar_lea.vmem %s2, %s248
      %s250 = smul.u32 32, %s19
      %p251 = scmp.lt.s32.totalorder %s250, 63
      %s252 = scalar_select %p251, %s250, 63
      %p253 = scmp.lt.s32.totalorder %s20, 0
      %s254 = scalar_select %p253, %s20, 0
      %s255 = sadd.s32 %s254, %s252
      %s256 = smul.addr %s255, 4
      %s257 = scalar_lea.vmem %s3, %s256
      %s258 = smul.u32 32, %s19
      %p260 = scmp.eq.s32.totalorder %s21, 0
      // Predicated region
      $region33: #{tpu_custom_call.1} parent=31 // pred_check
        %p261 = pneg %p260
      $region34: #{tpu_custom_call.1} parent=31 // pred_check_branch
        %263 = sbr.rel (%p261) target = $region36
      $region35: #{tpu_custom_call.1} parent=31 // pred_region
        %vm264 = vcmask 523264
        %265 = vst.msk [vmem:[#allocation2] sm:$0xff] %vm264, 0.0
        %266 = vst.msk [vmem:[#allocation2 + $0x8] sm:$0xff] %vm264, 0.0
        %267 = vst.msk [vmem:[#allocation2 + $0x10] sm:$0xff] %vm264, 0.0
        %268 = vst.msk [vmem:[#allocation2 + $0x18] sm:$0xff] %vm264, 0.0
        %269 = vst.msk [vmem:[#allocation2 + $0x20] sm:$0xff] %vm264, 0.0
        %270 = vst.msk [vmem:[#allocation2 + $0x28] sm:$0xff] %vm264, 0.0
        %271 = vst.msk [vmem:[#allocation2 + $0x30] sm:$0xff] %vm264, 0.0
        %272 = vst.msk [vmem:[#allocation2 + $0x38] sm:$0xff] %vm264, 0.0
        %273 = vst.msk [vmem:[#allocation2 + $0x40] sm:$0xff] %vm264, 0.0
        %274 = vst.msk [vmem:[#allocation2 + $0x48] sm:$0xff] %vm264, 0.0
        %275 = vst.msk [vmem:[#allocation2 + $0x50] sm:$0xff] %vm264, 0.0
        %276 = vst.msk [vmem:[#allocation2 + $0x58] sm:$0xff] %vm264, 0.0
        %277 = vst.msk [vmem:[#allocation2 + $0x60] sm:$0xff] %vm264, 0.0
        %278 = vst.msk [vmem:[#allocation2 + $0x68] sm:$0xff] %vm264, 0.0
        %279 = vst.msk [vmem:[#allocation2 + $0x70] sm:$0xff] %vm264, 0.0
        %280 = vst.msk [vmem:[#allocation2 + $0x78] sm:$0xff] %vm264, 0.0
        %281 = vst.msk [vmem:[#allocation2 + $0x80] sm:$0xff] %vm264, 0.0
        %282 = vst.msk [vmem:[#allocation2 + $0x88] sm:$0xff] %vm264, 0.0
        %283 = vst.msk [vmem:[#allocation2 + $0x90] sm:$0xff] %vm264, 0.0
        %284 = vst.msk [vmem:[#allocation2 + $0x98] sm:$0xff] %vm264, 0.0
        %285 = vst.msk [vmem:[#allocation2 + $0xa0] sm:$0xff] %vm264, 0.0
        %286 = vst.msk [vmem:[#allocation2 + $0xa8] sm:$0xff] %vm264, 0.0
        %287 = vst.msk [vmem:[#allocation2 + $0xb0] sm:$0xff] %vm264, 0.0
        %288 = vst.msk [vmem:[#allocation2 + $0xb8] sm:$0xff] %vm264, 0.0
        %289 = vst.msk [vmem:[#allocation2 + $0xc0] sm:$0xff] %vm264, 0.0
        %290 = vst.msk [vmem:[#allocation2 + $0xc8] sm:$0xff] %vm264, 0.0
        %291 = vst.msk [vmem:[#allocation2 + $0xd0] sm:$0xff] %vm264, 0.0
        %292 = vst.msk [vmem:[#allocation2 + $0xd8] sm:$0xff] %vm264, 0.0
        %293 = vst.msk [vmem:[#allocation2 + $0xe0] sm:$0xff] %vm264, 0.0
        %294 = vst.msk [vmem:[#allocation2 + $0xe8] sm:$0xff] %vm264, 0.0
        %295 = vst.msk [vmem:[#allocation2 + $0xf0] sm:$0xff] %vm264, 0.0
        %296 = vst.msk [vmem:[#allocation2 + $0xf8] sm:$0xff] %vm264, 0.0
      $region36: #{tpu_custom_call.1} parent=31 // pred_fallthru
        _
      %v297 = vld [vmem:[#allocation2] sm:$0xff]
      %v298 = vld [vmem:[#allocation2 + $0x8] sm:$0xff]
      %v299 = vld [vmem:[#allocation2 + $0x10] sm:$0xff]
      %v300 = vld [vmem:[#allocation2 + $0x18] sm:$0xff]
      %v301 = vld [vmem:[#allocation2 + $0x20] sm:$0xff]
      %v302 = vld [vmem:[#allocation2 + $0x28] sm:$0xff]
      %v303 = vld [vmem:[#allocation2 + $0x30] sm:$0xff]
      %v304 = vld [vmem:[#allocation2 + $0x38] sm:$0xff]
      %v305 = vld [vmem:[#allocation2 + $0x40] sm:$0xff]
      %v306 = vld [vmem:[#allocation2 + $0x48] sm:$0xff]
      %v307 = vld [vmem:[#allocation2 + $0x50] sm:$0xff]
      %v308 = vld [vmem:[#allocation2 + $0x58] sm:$0xff]
      %v309 = vld [vmem:[#allocation2 + $0x60] sm:$0xff]
      %v310 = vld [vmem:[#allocation2 + $0x68] sm:$0xff]
      %v311 = vld [vmem:[#allocation2 + $0x70] sm:$0xff]
      %v312 = vld [vmem:[#allocation2 + $0x78] sm:$0xff]
      %v313 = vld [vmem:[#allocation2 + $0x80] sm:$0xff]
      %v314 = vld [vmem:[#allocation2 + $0x88] sm:$0xff]
      %v315 = vld [vmem:[#allocation2 + $0x90] sm:$0xff]
      %v316 = vld [vmem:[#allocation2 + $0x98] sm:$0xff]
      %v317 = vld [vmem:[#allocation2 + $0xa0] sm:$0xff]
      %v318 = vld [vmem:[#allocation2 + $0xa8] sm:$0xff]
      %v319 = vld [vmem:[#allocation2 + $0xb0] sm:$0xff]
      %v320 = vld [vmem:[#allocation2 + $0xb8] sm:$0xff]
      %v321 = vld [vmem:[#allocation2 + $0xc0] sm:$0xff]
      %v322 = vld [vmem:[#allocation2 + $0xc8] sm:$0xff]
      %v323 = vld [vmem:[#allocation2 + $0xd0] sm:$0xff]
      %v324 = vld [vmem:[#allocation2 + $0xd8] sm:$0xff]
      %v325 = vld [vmem:[#allocation2 + $0xe0] sm:$0xff]
      %v326 = vld [vmem:[#allocation2 + $0xe8] sm:$0xff]
      %v327 = vld [vmem:[#allocation2 + $0xf0] sm:$0xff]
      %v328 = vld [vmem:[#allocation2 + $0xf8] sm:$0xff]
      %v329 = vld [vmem:[%s236] sm:$0xf]
      %v330 = vld [vmem:[%s236 + $0x4] sm:$0xf]
      %v331 = vld [vmem:[%s236 + $0x8] sm:$0xf]
      %v332 = vld [vmem:[%s236 + $0xc] sm:$0xf]
      %v333 = vld [vmem:[%s236 + $0x10] sm:$0xf]
      %v334 = vld [vmem:[%s236 + $0x14] sm:$0xf]
      %v335 = vld [vmem:[%s236 + $0x18] sm:$0xf]
      %v336 = vld [vmem:[%s236 + $0x1c] sm:$0xf]
      %v337 = vld [vmem:[%s236 + $0x20] sm:$0xf]
      %v338 = vld [vmem:[%s236 + $0x24] sm:$0xf]
      %v339 = vld [vmem:[%s236 + $0x28] sm:$0xf]
      %v340 = vld [vmem:[%s236 + $0x2c] sm:$0xf]
      %v341 = vld [vmem:[%s236 + $0x30] sm:$0xf]
      %v342 = vld [vmem:[%s236 + $0x34] sm:$0xf]
      %v343 = vld [vmem:[%s236 + $0x38] sm:$0xf]
      %v344 = vld [vmem:[%s236 + $0x3c] sm:$0xf]
      %v345 = vld [vmem:[%s236 + $0x40] sm:$0xf]
      %v346 = vld [vmem:[%s236 + $0x44] sm:$0xf]
      %v347 = vld [vmem:[%s236 + $0x48] sm:$0xf]
      %v348 = vld [vmem:[%s236 + $0x4c] sm:$0xf]
      %v349 = vld [vmem:[%s236 + $0x50] sm:$0xf]
      %v350 = vld [vmem:[%s236 + $0x54] sm:$0xf]
      %v351 = vld [vmem:[%s236 + $0x58] sm:$0xf]
      %v352 = vld [vmem:[%s236 + $0x5c] sm:$0xf]
      %v353 = vld [vmem:[%s236 + $0x60] sm:$0xf]
      %v354 = vld [vmem:[%s236 + $0x64] sm:$0xf]
      %v355 = vld [vmem:[%s236 + $0x68] sm:$0xf]
      %v356 = vld [vmem:[%s236 + $0x6c] sm:$0xf]
      %v357 = vld [vmem:[%s236 + $0x70] sm:$0xf]
      %v358 = vld [vmem:[%s236 + $0x74] sm:$0xf]
      %v359 = vld [vmem:[%s236 + $0x78] sm:$0xf]
      %v360 = vld [vmem:[%s236 + $0x7c] sm:$0xf]
      %v361 = vld [vmem:[%s245] sm:$0xf]
      %v362 = vld [vmem:[%s245 + $0x4] sm:$0xf]
      %v363 = vld [vmem:[%s245 + $0x8] sm:$0xf]
      %v364 = vld [vmem:[%s245 + $0xc] sm:$0xf]
      %v365 = vld [vmem:[%s245 + $0x10] sm:$0x3]
      %v398 = vunpack.c.l.b16 %v329
      %v399 = vunpack.c.l.b16 %v330
      %v400 = vunpack.c.l.b16 %v331
      %v401 = vunpack.c.l.b16 %v332
      %v402 = vunpack.c.l.b16 %v333
      %v403 = vunpack.c.l.b16 %v334
      %v404 = vunpack.c.l.b16 %v335
      %v405 = vunpack.c.l.b16 %v336
      %v406 = vunpack.c.l.b16 %v337
      %v407 = vunpack.c.l.b16 %v338
      %v408 = vunpack.c.l.b16 %v339
      %v409 = vunpack.c.l.b16 %v340
      %v410 = vunpack.c.l.b16 %v341
      %v411 = vunpack.c.l.b16 %v342
      %v412 = vunpack.c.l.b16 %v343
      %v413 = vunpack.c.l.b16 %v344
      %v414 = vunpack.c.l.b16 %v345
      %v415 = vunpack.c.l.b16 %v346
      %v416 = vunpack.c.l.b16 %v347
      %v417 = vunpack.c.l.b16 %v348
      %v418 = vunpack.c.l.b16 %v349
      %v419 = vunpack.c.l.b16 %v350
      %v420 = vunpack.c.l.b16 %v351
      %v421 = vunpack.c.l.b16 %v352
      %v422 = vunpack.c.l.b16 %v353
      %v423 = vunpack.c.l.b16 %v354
      %v424 = vunpack.c.l.b16 %v355
      %v425 = vunpack.c.l.b16 %v356
      %v426 = vunpack.c.l.b16 %v357
      %v427 = vunpack.c.l.b16 %v358
      %v428 = vunpack.c.l.b16 %v359
      %v429 = vunpack.c.l.b16 %v360
      %v430 = vpack.c.b16 %v399, %v398
      %v431 = vpack.c.b16 %v401, %v400
      %v432 = vpack.c.b16 %v403, %v402
      %v433 = vpack.c.b16 %v405, %v404
      %v434 = vpack.c.b16 %v407, %v406
      %v435 = vpack.c.b16 %v409, %v408
      %v436 = vpack.c.b16 %v411, %v410
      %v437 = vpack.c.b16 %v413, %v412
      %v438 = vpack.c.b16 %v415, %v414
      %v439 = vpack.c.b16 %v417, %v416
      %v440 = vpack.c.b16 %v419, %v418
      %v441 = vpack.c.b16 %v421, %v420
      %v442 = vpack.c.b16 %v423, %v422
      %v443 = vpack.c.b16 %v425, %v424
      %v444 = vpack.c.b16 %v427, %v426
      %v445 = vpack.c.b16 %v429, %v428
      %v451 = vunpack.c.l.b16 %v361
      %v452 = vunpack.c.l.b16 %v362
      %v453 = vunpack.c.l.b16 %v363
      %v454 = vunpack.c.l.b16 %v364
      %v455 = vunpack.c.l.b16 %v365
      %v456 = vpack.c.b16 %v452, %v451
      %v457 = vpack.c.b16 %v454, %v453
      %v458 = vpack.c.b16 %v455, %v455
      %vm461 = vcmask 293888
      %v463 = vsel %vm461, %v430, 0
      %v466 = vsel %vm461, %v431, 0
      %v469 = vsel %vm461, %v432, 0
      %v472 = vsel %vm461, %v433, 0
      %v475 = vsel %vm461, %v434, 0
      %v478 = vsel %vm461, %v435, 0
      %v481 = vsel %vm461, %v436, 0
      %v484 = vsel %vm461, %v437, 0
      %v487 = vsel %vm461, %v438, 0
      %v490 = vsel %vm461, %v439, 0
      %v493 = vsel %vm461, %v440, 0
      %v496 = vsel %vm461, %v441, 0
      %v499 = vsel %vm461, %v442, 0
      %v502 = vsel %vm461, %v443, 0
      %v505 = vsel %vm461, %v444, 0
      %v508 = vsel %vm461, %v445, 0
      %vm510 = vcmask 1041408
      %v512 = vsel %vm510, %v458, 0
      %514 = vmatprep.subr.bf16.mxu0 0
      %515 = vmatpush1.bf16.msra.mxu0 %v456
      %516 = vmatprep.subr.bf16.mxu0 0
      %517 = vmatpush1.bf16.msra.mxu0 %v457
      %518 = vmatprep.subr.bf16.mxu0 0
      %519 = vmatpush1.bf16.msra.mxu0 %v512
      %520 = vmatprep.subr.bf16.mxu0 0
      %521 = vmatpush1.bf16.msra.mxu0 0
      %522 = vmatprep.subr.bf16.mxu0 0
      %523 = vmatpush1.bf16.msra.mxu0 0
      %524 = vmatprep.subr.bf16.mxu0 0
      %525 = vmatpush1.bf16.msra.mxu0 0
      %526 = vmatprep.subr.bf16.mxu0 0
      %527 = vmatpush1.bf16.msra.mxu0 0
      %528 = vmatprep.subr.bf16.mxu0 0
      %529 = vmatpush1.bf16.msra.mxu0 0
      %530 = vmatprep.subr.bf16.mxu0 0
      %531 = vmatpush1.bf16.msra.mxu0 0
      %532 = vmatprep.subr.bf16.mxu0 0
      %533 = vmatpush1.bf16.msra.mxu0 0
      %534 = vmatprep.subr.bf16.mxu0 0
      %535 = vmatpush1.bf16.msra.mxu0 0
      %536 = vmatprep.subr.bf16.mxu0 0
      %537 = vmatpush1.bf16.msra.mxu0 0
      %538 = vmatprep.subr.bf16.mxu0 0
      %539 = vmatpush1.bf16.msra.mxu0 0
      %540 = vmatprep.subr.bf16.mxu0 0
      %541 = vmatpush1.bf16.msra.mxu0 0
      %542 = vmatprep.subr.bf16.mxu0 0
      %543 = vmatpush1.bf16.msra.mxu0 0
      %544 = vmatprep.subr.bf16.mxu0 0
      %545 = vmatpush1.bf16.msra.mxu0 0
      %546 = vmatprep.mubr.bf16.mxu0 0
      %547 = vmatmul.mubr.bf16.gmra.mrb[0].mxu0 %v463
      %v548 = vpop.f32.mrb[0].mxu0
      %v549 = vadd.f32 0.0, %v548
      %v550 = vpop.f32.mrb[0].mxu0
      %v551 = vpop.f32.mrb[0].mxu0
      %v552 = vadd.f32 0.0, %v551
      %v553 = vpop.f32.mrb[0].mxu0
      %554 = vmatprep.mubr.bf16.mxu0 0
      %555 = vmatmul.mubr.bf16.gmra.mrb[0].mxu0 %v466
      %v556 = vpop.f32.mrb[0].mxu0
      %v557 = vadd.f32 0.0, %v556
      %v558 = vpop.f32.mrb[0].mxu0
      %v559 = vpop.f32.mrb[0].mxu0
      %v560 = vadd.f32 0.0, %v559
      %v561 = vpop.f32.mrb[0].mxu0
      %562 = vmatprep.mubr.bf16.mxu0 0
      %563 = vmatmul.mubr.bf16.gmra.mrb[0].mxu0 %v469
      %v564 = vpop.f32.mrb[0].mxu0
      %v565 = vadd.f32 0.0, %v564
      %v566 = vpop.f32.mrb[0].mxu0
      %v567 = vpop.f32.mrb[0].mxu0
      %v568 = vadd.f32 0.0, %v567
      %v569 = vpop.f32.mrb[0].mxu0
      %570 = vmatprep.mubr.bf16.mxu0 0
      %571 = vmatmul.mubr.bf16.gmra.mrb[0].mxu0 %v472
      %v572 = vpop.f32.mrb[0].mxu0
      %v573 = vadd.f32 0.0, %v572
      %v574 = vpop.f32.mrb[0].mxu0
      %v575 = vpop.f32.mrb[0].mxu0
      %v576 = vadd.f32 0.0, %v575
      %v577 = vpop.f32.mrb[0].mxu0
      %578 = vmatprep.mubr.bf16.mxu0 0
      %579 = vmatmul.mubr.bf16.gmra.mrb[0].mxu0 %v475
      %v580 = vpop.f32.mrb[0].mxu0
      %v581 = vadd.f32 0.0, %v580
      %v582 = vpop.f32.mrb[0].mxu0
      %v583 = vpop.f32.mrb[0].mxu0
      %v584 = vadd.f32 0.0, %v583
      %v585 = vpop.f32.mrb[0].mxu0
      %586 = vmatprep.mubr.bf16.mxu0 0
      %587 = vmatmul.mubr.bf16.gmra.mrb[0].mxu0 %v478
      %v588 = vpop.f32.mrb[0].mxu0
      %v589 = vadd.f32 0.0, %v588
      %v590 = vpop.f32.mrb[0].mxu0
      %v591 = vpop.f32.mrb[0].mxu0
      %v592 = vadd.f32 0.0, %v591
      %v593 = vpop.f32.mrb[0].mxu0
      %594 = vmatprep.mubr.bf16.mxu0 0
      %595 = vmatmul.mubr.bf16.gmra.mrb[0].mxu0 %v481
      %v596 = vpop.f32.mrb[0].mxu0
      %v597 = vadd.f32 0.0, %v596
      %v598 = vpop.f32.mrb[0].mxu0
      %v599 = vpop.f32.mrb[0].mxu0
      %v600 = vadd.f32 0.0, %v599
      %v601 = vpop.f32.mrb[0].mxu0
      %602 = vmatprep.mubr.bf16.mxu0 0
      %603 = vmatmul.mubr.bf16.gmra.mrb[0].mxu0 %v484
      %v604 = vpop.f32.mrb[0].mxu0
      %v605 = vadd.f32 0.0, %v604
      %v606 = vpop.f32.mrb[0].mxu0
      %v607 = vpop.f32.mrb[0].mxu0
      %v608 = vadd.f32 0.0, %v607
      %v609 = vpop.f32.mrb[0].mxu0
      %610 = vmatprep.mubr.bf16.mxu0 0
      %611 = vmatmul.mubr.bf16.gmra.mrb[0].mxu0 %v487
      %v612 = vpop.f32.mrb[0].mxu0
      %v613 = vadd.f32 0.0, %v612
      %v614 = vpop.f32.mrb[0].mxu0
      %v615 = vpop.f32.mrb[0].mxu0
      %v616 = vadd.f32 0.0, %v615
      %v617 = vpop.f32.mrb[0].mxu0
      %618 = vmatprep.mubr.bf16.mxu0 0
      %619 = vmatmul.mubr.bf16.gmra.mrb[0].mxu0 %v490
      %v620 = vpop.f32.mrb[0].mxu0
      %v621 = vadd.f32 0.0, %v620
      %v622 = vpop.f32.mrb[0].mxu0
      %v623 = vpop.f32.mrb[0].mxu0
      %v624 = vadd.f32 0.0, %v623
      %v625 = vpop.f32.mrb[0].mxu0
      %626 = vmatprep.mubr.bf16.mxu0 0
      %627 = vmatmul.mubr.bf16.gmra.mrb[0].mxu0 %v493
      %v628 = vpop.f32.mrb[0].mxu0
      %v629 = vadd.f32 0.0, %v628
      %v630 = vpop.f32.mrb[0].mxu0
      %v631 = vpop.f32.mrb[0].mxu0
      %v632 = vadd.f32 0.0, %v631
      %v633 = vpop.f32.mrb[0].mxu0
      %634 = vmatprep.mubr.bf16.mxu0 0
      %635 = vmatmul.mubr.bf16.gmra.mrb[0].mxu0 %v496
      %v636 = vpop.f32.mrb[0].mxu0
      %v637 = vadd.f32 0.0, %v636
      %v638 = vpop.f32.mrb[0].mxu0
      %v639 = vpop.f32.mrb[0].mxu0
      %v640 = vadd.f32 0.0, %v639
      %v641 = vpop.f32.mrb[0].mxu0
      %642 = vmatprep.mubr.bf16.mxu0 0
      %643 = vmatmul.mubr.bf16.gmra.mrb[0].mxu0 %v499
      %v644 = vpop.f32.mrb[0].mxu0
      %v645 = vadd.f32 0.0, %v644
      %v646 = vpop.f32.mrb[0].mxu0
      %v647 = vpop.f32.mrb[0].mxu0
      %v648 = vadd.f32 0.0, %v647
      %v649 = vpop.f32.mrb[0].mxu0
      %650 = vmatprep.mubr.bf16.mxu0 0
      %651 = vmatmul.mubr.bf16.gmra.mrb[0].mxu0 %v502
      %v652 = vpop.f32.mrb[0].mxu0
      %v653 = vadd.f32 0.0, %v652
      %v654 = vpop.f32.mrb[0].mxu0
      %v655 = vpop.f32.mrb[0].mxu0
      %v656 = vadd.f32 0.0, %v655
      %v657 = vpop.f32.mrb[0].mxu0
      %658 = vmatprep.mubr.bf16.mxu0 0
      %659 = vmatmul.mubr.bf16.gmra.mrb[0].mxu0 %v505
      %v660 = vpop.f32.mrb[0].mxu0
      %v661 = vadd.f32 0.0, %v660
      %v662 = vpop.f32.mrb[0].mxu0
      %v663 = vpop.f32.mrb[0].mxu0
      %v664 = vadd.f32 0.0, %v663
      %v665 = vpop.f32.mrb[0].mxu0
      %666 = vmatprep.mubr.bf16.mxu0 0
      %667 = vmatmul.mubr.bf16.gmra.mrb[0].mxu0 %v508
      %v668 = vpop.f32.mrb[0].mxu0
      %v669 = vadd.f32 0.0, %v668
      %v670 = vpop.f32.mrb[0].mxu0
      %v671 = vpop.f32.mrb[0].mxu0
      %v672 = vadd.f32 0.0, %v671
      %v673 = vpop.f32.mrb[0].mxu0
      %674 = vdwg.mxu0
      %v675 = vadd.f32 %v297, %v549
      %v676 = vadd.f32 %v298, %v552
      %v677 = vadd.f32 %v299, %v557
      %v678 = vadd.f32 %v300, %v560
      %v679 = vadd.f32 %v301, %v565
      %v680 = vadd.f32 %v302, %v568
      %v681 = vadd.f32 %v303, %v573
      %v682 = vadd.f32 %v304, %v576
      %v683 = vadd.f32 %v305, %v581
      %v684 = vadd.f32 %v306, %v584
      %v685 = vadd.f32 %v307, %v589
      %v686 = vadd.f32 %v308, %v592
      %v687 = vadd.f32 %v309, %v597
      %v688 = vadd.f32 %v310, %v600
      %v689 = vadd.f32 %v311, %v605
      %v690 = vadd.f32 %v312, %v608
      %v691 = vadd.f32 %v313, %v613
      %v692 = vadd.f32 %v314, %v616
      %v693 = vadd.f32 %v315, %v621
      %v694 = vadd.f32 %v316, %v624
      %v695 = vadd.f32 %v317, %v629
      %v696 = vadd.f32 %v318, %v632
      %v697 = vadd.f32 %v319, %v637
      %v698 = vadd.f32 %v320, %v640
      %v699 = vadd.f32 %v321, %v645
      %v700 = vadd.f32 %v322, %v648
      %v701 = vadd.f32 %v323, %v653
      %v702 = vadd.f32 %v324, %v656
      %v703 = vadd.f32 %v325, %v661
      %v704 = vadd.f32 %v326, %v664
      %v705 = vadd.f32 %v327, %v669
      %v706 = vadd.f32 %v328, %v672
      %vm707 = vcmask 523264
      %708 = vst.msk [vmem:[#allocation2] sm:$0xff] %vm707, %v675
      %709 = vst.msk [vmem:[#allocation2 + $0x8] sm:$0xff] %vm707, %v676
      %710 = vst.msk [vmem:[#allocation2 + $0x10] sm:$0xff] %vm707, %v677
      %711 = vst.msk [vmem:[#allocation2 + $0x18] sm:$0xff] %vm707, %v678
      %712 = vst.msk [vmem:[#allocation2 + $0x20] sm:$0xff] %vm707, %v679
      %713 = vst.msk [vmem:[#allocation2 + $0x28] sm:$0xff] %vm707, %v680
      %714 = vst.msk [vmem:[#allocation2 + $0x30] sm:$0xff] %vm707, %v681
      %715 = vst.msk [vmem:[#allocation2 + $0x38] sm:$0xff] %vm707, %v682
      %716 = vst.msk [vmem:[#allocation2 + $0x40] sm:$0xff] %vm707, %v683
      %717 = vst.msk [vmem:[#allocation2 + $0x48] sm:$0xff] %vm707, %v684
      %718 = vst.msk [vmem:[#allocation2 + $0x50] sm:$0xff] %vm707, %v685
      %719 = vst.msk [vmem:[#allocation2 + $0x58] sm:$0xff] %vm707, %v686
      %720 = vst.msk [vmem:[#allocation2 + $0x60] sm:$0xff] %vm707, %v687
      %721 = vst.msk [vmem:[#allocation2 + $0x68] sm:$0xff] %vm707, %v688
      %722 = vst.msk [vmem:[#allocation2 + $0x70] sm:$0xff] %vm707, %v689
      %723 = vst.msk [vmem:[#allocation2 + $0x78] sm:$0xff] %vm707, %v690
      %724 = vst.msk [vmem:[#allocation2 + $0x80] sm:$0xff] %vm707, %v691
      %725 = vst.msk [vmem:[#allocation2 + $0x88] sm:$0xff] %vm707, %v692
      %726 = vst.msk [vmem:[#allocation2 + $0x90] sm:$0xff] %vm707, %v693
      %727 = vst.msk [vmem:[#allocation2 + $0x98] sm:$0xff] %vm707, %v694
      %728 = vst.msk [vmem:[#allocation2 + $0xa0] sm:$0xff] %vm707, %v695
      %729 = vst.msk [vmem:[#allocation2 + $0xa8] sm:$0xff] %vm707, %v696
      %730 = vst.msk [vmem:[#allocation2 + $0xb0] sm:$0xff] %vm707, %v697
      %731 = vst.msk [vmem:[#allocation2 + $0xb8] sm:$0xff] %vm707, %v698
      %732 = vst.msk [vmem:[#allocation2 + $0xc0] sm:$0xff] %vm707, %v699
      %733 = vst.msk [vmem:[#allocation2 + $0xc8] sm:$0xff] %vm707, %v700
      %734 = vst.msk [vmem:[#allocation2 + $0xd0] sm:$0xff] %vm707, %v701
      %735 = vst.msk [vmem:[#allocation2 + $0xd8] sm:$0xff] %vm707, %v702
      %736 = vst.msk [vmem:[#allocation2 + $0xe0] sm:$0xff] %vm707, %v703
      %737 = vst.msk [vmem:[#allocation2 + $0xe8] sm:$0xff] %vm707, %v704
      %738 = vst.msk [vmem:[#allocation2 + $0xf0] sm:$0xff] %vm707, %v705
      %739 = vst.msk [vmem:[#allocation2 + $0xf8] sm:$0xff] %vm707, %v706
      // Predicated region
      $region37: #{tpu_custom_call.1} parent=31 // pred_check
        %p740 = pneg %p260
      $region38: #{tpu_custom_call.1} parent=31 // pred_check_branch
        %742 = sbr.rel (%p740) target = $region40
      $region39: #{tpu_custom_call.1} parent=31 // pred_region
        %v743 = vld [vmem:[#allocation2] sm:$0xff]
        %v744 = vld [vmem:[#allocation2 + $0x8] sm:$0xff]
        %v745 = vld [vmem:[#allocation2 + $0x10] sm:$0xff]
        %v746 = vld [vmem:[#allocation2 + $0x18] sm:$0xff]
        %v747 = vld [vmem:[#allocation2 + $0x20] sm:$0xff]
        %v748 = vld [vmem:[#allocation2 + $0x28] sm:$0xff]
        %v749 = vld [vmem:[#allocation2 + $0x30] sm:$0xff]
        %v750 = vld [vmem:[#allocation2 + $0x38] sm:$0xff]
        %v751 = vld [vmem:[#allocation2 + $0x40] sm:$0xff]
        %v752 = vld [vmem:[#allocation2 + $0x48] sm:$0xff]
        %v753 = vld [vmem:[#allocation2 + $0x50] sm:$0xff]
        %v754 = vld [vmem:[#allocation2 + $0x58] sm:$0xff]
        %v755 = vld [vmem:[#allocation2 + $0x60] sm:$0xff]
        %v756 = vld [vmem:[#allocation2 + $0x68] sm:$0xff]
        %v757 = vld [vmem:[#allocation2 + $0x70] sm:$0xff]
        %v758 = vld [vmem:[#allocation2 + $0x78] sm:$0xff]
        %v759 = vld [vmem:[#allocation2 + $0x80] sm:$0xff]
        %v760 = vld [vmem:[#allocation2 + $0x88] sm:$0xff]
        %v761 = vld [vmem:[#allocation2 + $0x90] sm:$0xff]
        %v762 = vld [vmem:[#allocation2 + $0x98] sm:$0xff]
        %v763 = vld [vmem:[#allocation2 + $0xa0] sm:$0xff]
        %v764 = vld [vmem:[#allocation2 + $0xa8] sm:$0xff]
        %v765 = vld [vmem:[#allocation2 + $0xb0] sm:$0xff]
        %v766 = vld [vmem:[#allocation2 + $0xb8] sm:$0xff]
        %v767 = vld [vmem:[#allocation2 + $0xc0] sm:$0xff]
        %v768 = vld [vmem:[#allocation2 + $0xc8] sm:$0xff]
        %v769 = vld [vmem:[#allocation2 + $0xd0] sm:$0xff]
        %v770 = vld [vmem:[#allocation2 + $0xd8] sm:$0xff]
        %v771 = vld [vmem:[#allocation2 + $0xe0] sm:$0xff]
        %v772 = vld [vmem:[#allocation2 + $0xe8] sm:$0xff]
        %v773 = vld [vmem:[#allocation2 + $0xf0] sm:$0xff]
        %v774 = vld [vmem:[#allocation2 + $0xf8] sm:$0xff]
        %v775 = vld [vmem:[%s249] sm:$0x1]
        %v777 = vlaneseq
        %v778 = vshrl.u32 %v777, 7
        %v779 = vsub.s32 0, %v778
        %v780 = vrot.slane %v775, %v779
        %v782 = vadd.f32 %v743, %v780
        %v783 = vadd.f32 %v744, %v780
        %v784 = vadd.f32 %v745, %v780
        %v785 = vadd.f32 %v746, %v780
        %v786 = vadd.f32 %v747, %v780
        %v787 = vadd.f32 %v748, %v780
        %v788 = vadd.f32 %v749, %v780
        %v789 = vadd.f32 %v750, %v780
        %v790 = vadd.f32 %v751, %v780
        %v791 = vadd.f32 %v752, %v780
        %v792 = vadd.f32 %v753, %v780
        %v793 = vadd.f32 %v754, %v780
        %v794 = vadd.f32 %v755, %v780
        %v795 = vadd.f32 %v756, %v780
        %v796 = vadd.f32 %v757, %v780
        %v797 = vadd.f32 %v758, %v780
        %v798 = vadd.f32 %v759, %v780
        %v799 = vadd.f32 %v760, %v780
        %v800 = vadd.f32 %v761, %v780
        %v801 = vadd.f32 %v762, %v780
        %v802 = vadd.f32 %v763, %v780
        %v803 = vadd.f32 %v764, %v780
        %v804 = vadd.f32 %v765, %v780
        %v805 = vadd.f32 %v766, %v780
        %v806 = vadd.f32 %v767, %v780
        %v807 = vadd.f32 %v768, %v780
        %v808 = vadd.f32 %v769, %v780
        %v809 = vadd.f32 %v770, %v780
        %v810 = vadd.f32 %v771, %v780
        %v811 = vadd.f32 %v772, %v780
        %v812 = vadd.f32 %v773, %v780
        %v813 = vadd.f32 %v774, %v780
        %v814 = vmax.f32 %v782, 0.0
        %v815 = vmax.f32 %v783, 0.0
        %v816 = vmax.f32 %v784, 0.0
        %v817 = vmax.f32 %v785, 0.0
        %v818 = vmax.f32 %v786, 0.0
        %v819 = vmax.f32 %v787, 0.0
        %v820 = vmax.f32 %v788, 0.0
        %v821 = vmax.f32 %v789, 0.0
        %v822 = vmax.f32 %v790, 0.0
        %v823 = vmax.f32 %v791, 0.0
        %v824 = vmax.f32 %v792, 0.0
        %v825 = vmax.f32 %v793, 0.0
        %v826 = vmax.f32 %v794, 0.0
        %v827 = vmax.f32 %v795, 0.0
        %v828 = vmax.f32 %v796, 0.0
        %v829 = vmax.f32 %v797, 0.0
        %v830 = vmax.f32 %v798, 0.0
        %v831 = vmax.f32 %v799, 0.0
        %v832 = vmax.f32 %v800, 0.0
        %v833 = vmax.f32 %v801, 0.0
        %v834 = vmax.f32 %v802, 0.0
        %v835 = vmax.f32 %v803, 0.0
        %v836 = vmax.f32 %v804, 0.0
        %v837 = vmax.f32 %v805, 0.0
        %v838 = vmax.f32 %v806, 0.0
        %v839 = vmax.f32 %v807, 0.0
        %v840 = vmax.f32 %v808, 0.0
        %v841 = vmax.f32 %v809, 0.0
        %v842 = vmax.f32 %v810, 0.0
        %v843 = vmax.f32 %v811, 0.0
        %v844 = vmax.f32 %v812, 0.0
        %v845 = vmax.f32 %v813, 0.0
        %v846 = vpack.c.bf16 %v815, %v814
        %v847 = vpack.c.bf16 %v817, %v816
        %v848 = vpack.c.bf16 %v819, %v818
        %v849 = vpack.c.bf16 %v821, %v820
        %v850 = vpack.c.bf16 %v823, %v822
        %v851 = vpack.c.bf16 %v825, %v824
        %v852 = vpack.c.bf16 %v827, %v826
        %v853 = vpack.c.bf16 %v829, %v828
        %v854 = vpack.c.bf16 %v831, %v830
        %v855 = vpack.c.bf16 %v833, %v832
        %v856 = vpack.c.bf16 %v835, %v834
        %v857 = vpack.c.bf16 %v837, %v836
        %v858 = vpack.c.bf16 %v839, %v838
        %v859 = vpack.c.bf16 %v841, %v840
        %v860 = vpack.c.bf16 %v843, %v842
        %v861 = vpack.c.bf16 %v845, %v844
        %v878 = vunpack.c.l.b16 %v846
        %v879 = vunpack.c.h.b16 %v846
        %v880 = vunpack.c.l.b16 %v847
        %v881 = vunpack.c.h.b16 %v847
        %v882 = vunpack.c.l.b16 %v848
        %v883 = vunpack.c.h.b16 %v848
        %v884 = vunpack.c.l.b16 %v849
        %v885 = vunpack.c.h.b16 %v849
        %v886 = vunpack.c.l.b16 %v850
        %v887 = vunpack.c.h.b16 %v850
        %v888 = vunpack.c.l.b16 %v851
        %v889 = vunpack.c.h.b16 %v851
        %v890 = vunpack.c.l.b16 %v852
        %v891 = vunpack.c.h.b16 %v852
        %v892 = vunpack.c.l.b16 %v853
        %v893 = vunpack.c.h.b16 %v853
        %v894 = vunpack.c.l.b16 %v854
        %v895 = vunpack.c.h.b16 %v854
        %v896 = vunpack.c.l.b16 %v855
        %v897 = vunpack.c.h.b16 %v855
        %v898 = vunpack.c.l.b16 %v856
        %v899 = vunpack.c.h.b16 %v856
        %v900 = vunpack.c.l.b16 %v857
        %v901 = vunpack.c.h.b16 %v857
        %v902 = vunpack.c.l.b16 %v858
        %v903 = vunpack.c.h.b16 %v858
        %v904 = vunpack.c.l.b16 %v859
        %v905 = vunpack.c.h.b16 %v859
        %v906 = vunpack.c.l.b16 %v860
        %v907 = vunpack.c.h.b16 %v860
        %v908 = vunpack.c.l.b16 %v861
        %v909 = vunpack.c.h.b16 %v861
        %v910 = vpack.c.b16 %v878, %v878
        %v911 = vpack.c.b16 %v879, %v879
        %v912 = vpack.c.b16 %v880, %v880
        %v913 = vpack.c.b16 %v881, %v881
        %v914 = vpack.c.b16 %v882, %v882
        %v915 = vpack.c.b16 %v883, %v883
        %v916 = vpack.c.b16 %v884, %v884
        %v917 = vpack.c.b16 %v885, %v885
        %v918 = vpack.c.b16 %v886, %v886
        %v919 = vpack.c.b16 %v887, %v887
        %v920 = vpack.c.b16 %v888, %v888
        %v921 = vpack.c.b16 %v889, %v889
        %v922 = vpack.c.b16 %v890, %v890
        %v923 = vpack.c.b16 %v891, %v891
        %v924 = vpack.c.b16 %v892, %v892
        %v925 = vpack.c.b16 %v893, %v893
        %v926 = vpack.c.b16 %v894, %v894
        %v927 = vpack.c.b16 %v895, %v895
        %v928 = vpack.c.b16 %v896, %v896
        %v929 = vpack.c.b16 %v897, %v897
        %v930 = vpack.c.b16 %v898, %v898
        %v931 = vpack.c.b16 %v899, %v899
        %v932 = vpack.c.b16 %v900, %v900
        %v933 = vpack.c.b16 %v901, %v901
        %v934 = vpack.c.b16 %v902, %v902
        %v935 = vpack.c.b16 %v903, %v903
        %v936 = vpack.c.b16 %v904, %v904
        %v937 = vpack.c.b16 %v905, %v905
        %v938 = vpack.c.b16 %v906, %v906
        %v939 = vpack.c.b16 %v907, %v907
        %v940 = vpack.c.b16 %v908, %v908
        %v941 = vpack.c.b16 %v909, %v909
        %vm974 = vcmask 519168
        %975 = vst.msk [vmem:[%s257] sm:$0xf] %vm974, %v910
        %976 = vst.msk [vmem:[%s257 + $0x4] sm:$0xf] %vm974, %v911
        %977 = vst.msk [vmem:[%s257 + $0x8] sm:$0xf] %vm974, %v912
        %978 = vst.msk [vmem:[%s257 + $0xc] sm:$0xf] %vm974, %v913
        %979 = vst.msk [vmem:[%s257 + $0x10] sm:$0xf] %vm974, %v914
        %980 = vst.msk [vmem:[%s257 + $0x14] sm:$0xf] %vm974, %v915
        %981 = vst.msk [vmem:[%s257 + $0x18] sm:$0xf] %vm974, %v916
        %982 = vst.msk [vmem:[%s257 + $0x1c] sm:$0xf] %vm974, %v917
        %983 = vst.msk [vmem:[%s257 + $0x20] sm:$0xf] %vm974, %v918
        %984 = vst.msk [vmem:[%s257 + $0x24] sm:$0xf] %vm974, %v919
        %985 = vst.msk [vmem:[%s257 + $0x28] sm:$0xf] %vm974, %v920
        %986 = vst.msk [vmem:[%s257 + $0x2c] sm:$0xf] %vm974, %v921
        %987 = vst.msk [vmem:[%s257 + $0x30] sm:$0xf] %vm974, %v922
        %988 = vst.msk [vmem:[%s257 + $0x34] sm:$0xf] %vm974, %v923
        %989 = vst.msk [vmem:[%s257 + $0x38] sm:$0xf] %vm974, %v924
        %990 = vst.msk [vmem:[%s257 + $0x3c] sm:$0xf] %vm974, %v925
        %991 = vst.msk [vmem:[%s257 + $0x40] sm:$0xf] %vm974, %v926
        %992 = vst.msk [vmem:[%s257 + $0x44] sm:$0xf] %vm974, %v927
        %993 = vst.msk [vmem:[%s257 + $0x48] sm:$0xf] %vm974, %v928
        %994 = vst.msk [vmem:[%s257 + $0x4c] sm:$0xf] %vm974, %v929
        %995 = vst.msk [vmem:[%s257 + $0x50] sm:$0xf] %vm974, %v930
        %996 = vst.msk [vmem:[%s257 + $0x54] sm:$0xf] %vm974, %v931
        %997 = vst.msk [vmem:[%s257 + $0x58] sm:$0xf] %vm974, %v932
        %998 = vst.msk [vmem:[%s257 + $0x5c] sm:$0xf] %vm974, %v933
        %999 = vst.msk [vmem:[%s257 + $0x60] sm:$0xf] %vm974, %v934
        %1000 = vst.msk [vmem:[%s257 + $0x64] sm:$0xf] %vm974, %v935
        %1001 = vst.msk [vmem:[%s257 + $0x68] sm:$0xf] %vm974, %v936
        %1002 = vst.msk [vmem:[%s257 + $0x6c] sm:$0xf] %vm974, %v937
        %1003 = vst.msk [vmem:[%s257 + $0x70] sm:$0xf] %vm974, %v938
        %1004 = vst.msk [vmem:[%s257 + $0x74] sm:$0xf] %vm974, %v939
        %1005 = vst.msk [vmem:[%s257 + $0x78] sm:$0xf] %vm974, %v940
        %1006 = vst.msk [vmem:[%s257 + $0x7c] sm:$0xf] %vm974, %v941
      $region40: #{tpu_custom_call.1} parent=31 // pred_fallthru
        _
      %s1007 = smul.u32 32, %s19
      %p1008 = scmp.lt.s32.totalorder %s1007, 63
      %s1009 = scalar_select %p1008, %s1007, 63
      %p1010 = scmp.lt.s32.totalorder %s20, 0
      %s1011 = scalar_select %p1010, %s20, 0
      %s1012 = sadd.s32 %s1011, %s1009
      %s1013 = smul.addr %s1012, 4
      %s1014 = scalar_lea.vmem %s3, %s1013
      // Predicated region
      $region41: #{tpu_custom_call.1} parent=31 // pred_check
        %p1015 = pneg %p135
      $region42: #{tpu_custom_call.1} parent=31 // pred_check_branch
        %1017 = sbr.rel (%p1015) target = $region44
      $region43: #{tpu_custom_call.1} parent=31 // pred_region
        %s1018 = smul.u32 32, %s19
      $region44: #{tpu_custom_call.1} parent=31 // pred_fallthru
        _
    $region32: #{tpu_custom_call.1} parent=5 // pred_fallthru
      _
    %p1019 = scmp.le.s32.totalorder 2, %s9
    // Predicated region
    $region45: #{tpu_custom_call.1} parent=5 // pred_check
      %p1020 = pneg %p1019
    $region46: #{tpu_custom_call.1} parent=5 // pred_check_branch
      %1022 = sbr.rel (%p1020) target = $region48
    $region47: #{tpu_custom_call.1} parent=5 // pred_region
      %s1023 = ssub.s32 %s9, 2
      // Predicated region
      $region49: #{tpu_custom_call.1} parent=47 // pred_check
        %p1024 = pneg %p141
      $region50: #{tpu_custom_call.1} parent=47 // pred_check_branch
        %1026 = sbr.rel (%p1024) target = $region52
      $region51: #{tpu_custom_call.1} parent=47 // pred_region
        %s1027 = smul.u32 32, %s22
        %p1028 = scmp.lt.s32.totalorder %s1027, 63
        %s1029 = scalar_select %p1028, %s1027, 63
        %p1030 = scmp.lt.s32.totalorder %s23, 0
        %s1031 = scalar_select %p1030, %s23, 0
        %s1032 = sadd.s32 %s1031, %s1029
        %s1033 = smul.addr %s1032, 4
        %s1034 = scalar_lea.vmem %s3, %s1033
      $region52: #{tpu_custom_call.1} parent=47 // pred_fallthru
        _
    $region48: #{tpu_custom_call.1} parent=5 // pred_fallthru
      _
  $region6: #{tpu_custom_call.1} parent=0 // loop_footer
    %s13 = sadd.s32 1, %s9
  $region7: #{tpu_custom_call.1} parent=0 // loop_footer_branch
    %8 = sbr.rel target = $region3
  $region8: #{tpu_custom_call.1} parent=0 // loop_exit
    _

</llo_original>
